<compile_context>
chip_gen: v5e
topology: v5e:2x2
jax: 0.10.0
libtpu: 0.0.40
codegen_flags: <defaults>
</compile_context>

<pallas_src>
import math

import numpy as np
import jax
import jax.numpy as jnp
from jax.experimental import pallas as pl
from jax.experimental.pallas import tpu as pltpu


_TARGET_BLOCK_BYTES = 4 * 1024 * 1024   # ~4 MiB x-block (review: amortizes v7x per-step cost)
_VMEM_LIMIT_BYTES = 48 * 1024 * 1024    # safe on v5e/v6e (128 MiB) and v7x (64 MiB per TC)


def _sublane_pack(itemsize):
    # sublane packing: 8 rows for 4-byte, 16 for 2-byte, 32 for 1-byte dtypes
    return max(8, 32 // max(int(itemsize), 1))


def _choose_row_tile(n_rows, n_cols, itemsize):
    pack = _sublane_pack(itemsize)
    per_row = n_cols * max(int(itemsize), 4)        # account for f32 intermediates (bf16 in)
    rows = max(1, _TARGET_BLOCK_BYTES // max(per_row, 1))
    rows = max(pack, (rows // pack) * pack)
    return n_rows if rows >= n_rows else rows


def _pe_lane_consts(d_model, batch_in_row, k):
    """Per-lane constants (2, L) for the (rows, L = k*batch_in_row*d_model) view.

    arg(row, lane) = row * a[lane] + c[lane]  with
      a = k * inv_freq[d],  c = pos_off * inv_freq[d] - phase[d],
      d = lane % d_model,   pos_off = lane // (batch_in_row * d_model),
    and pe = cos(arg)  (phase pi/2 on even d turns cos into sin)."""
    L = k * batch_in_row * d_model
    half = np.arange(0, d_model, 2, dtype=np.float32)
    div_term = np.exp(half * np.float32(-math.log(10000.0) / d_model))
    inv_freq = np.repeat(div_term, 2)[:d_model].astype(np.float32)          # (D,)
    phase = np.where(np.arange(d_model) % 2 == 0,
                     np.float32(np.pi / 2.0), np.float32(0.0)).astype(np.float32)
    lanes = np.arange(L)
    d_l = lanes % d_model
    pos_off = (lanes // (batch_in_row * d_model)).astype(np.float32)
    a = (np.float32(k) * inv_freq[d_l]).astype(np.float32)
    c = (pos_off * inv_freq[d_l] - phase[d_l]).astype(np.float32)
    return np.stack([a, c], axis=0)                                          # (2, L) f32


def _plan_view(S, B, D):
    """Pick a lane-dense 2-D view of (S, B, D).

    Returns (consts (2, L) np.float32, n_rows, n_cols, row_divisor) where the
    position of row r is r // row_divisor (row_divisor == 1 for the packed view)."""
    if D % 128 == 0:
        # rows view: lane-dense already, finest row granularity
        return _pe_lane_consts(D, batch_in_row=1, k=1), S * B, D, B
    for k in range(1, 17):
        if (k * B * D) % 128 == 0 and S % k == 0:
            # pack k positions per slab row so the lane dim is a 128-multiple
            return _pe_lane_consts(D, batch_in_row=B, k=k), S // k, k * B * D, 1
    # TODO(synk): no 128-multiple packing exists (D % 128 != 0 and no k divides S);
    # this fallback view has partially-masked lanes (reduced vld/vst utilization).
    return _pe_lane_consts(D, batch_in_row=1, k=1), S * B, D, B


def _build_kernel(*, row_divisor, p, training, use_hw_prng):
    inv_keep = 1.0 / (1.0 - p) if p < 1.0 else 0.0
    # Drop iff bits < p * 2^32 (keep prob = 1 - p); pure integer compare, no fmul.
    threshold = np.uint32(min(int(round(p * (1 << 32))), (1 << 32) - 1))

    def add_pe(consts_ref, x_ref):
        tr = x_ref.shape[0]
        row0 = pl.program_id(0) * tr
        rows = row0 + jax.lax.broadcasted_iota(jnp.int32, (tr, 1), 0)       # (TR, 1)
        if row_divisor > 1:
            rows = rows // row_divisor                                       # position of row
        pos = rows.astype(jnp.float32)
        a = consts_ref[0:1, :]                                               # (1, L) resident
        c = consts_ref[1:2, :]                                               # (1, L) resident
        pe = jnp.cos(pos * a + c)                                            # (TR, L) f32
        return x_ref[...].astype(jnp.float32) + pe

    def dropout(y, bits_u32):
        keep = bits_u32 >= threshold
        return jnp.where(keep, y * inv_keep, jnp.zeros_like(y))

    if not (training and p > 0.0):
        def kernel(consts_ref, x_ref, o_ref):
            o_ref[...] = add_pe(consts_ref, x_ref).astype(o_ref.dtype)
        return kernel

    if use_hw_prng:
        def kernel(seed_ref, consts_ref, x_ref, o_ref):
            y = add_pe(consts_ref, x_ref)
            # Distinct stream per grid tile.
            # TODO(synk): fold a device/axis index into the seed under pmap/shard_map so
            # data-parallel replicas do not share the same dropout mask.
            pltpu.prng_seed(seed_ref[0], pl.program_id(0))
            bits = pltpu.bitcast(pltpu.prng_random_bits(y.shape), jnp.uint32)
            o_ref[...] = dropout(y, bits).astype(o_ref.dtype)
        return kernel

    def kernel(consts_ref, x_ref, bits_ref, o_ref):                          # portable path
        y = add_pe(consts_ref, x_ref)
        o_ref[...] = dropout(y, bits_ref[...]).astype(o_ref.dtype)
    return kernel


def _compiler_param_attempts(on_tpu, num_tiles):
    if not on_tpu:
        return [None]
    attempts = []
    kind = ""
    try:
        kind = jax.devices()[0].device_kind.lower()
    except Exception:
        pass
    if num_tiles > 1 and "7" in kind and hasattr(pltpu, "CORE_PARALLEL"):
        # v7x has 2 TensorCores per chip; plain "parallel" does not shard the grid there.
        attempts.append(pltpu.CompilerParams(
            dimension_semantics=(pltpu.CORE_PARALLEL,),
            vmem_limit_bytes=_VMEM_LIMIT_BYTES))
    attempts.append(pltpu.CompilerParams(
        dimension_semantics=("parallel",),
        vmem_limit_bytes=_VMEM_LIMIT_BYTES))
    return attempts


def positional_encoding_forward(x, *, p=0.1, training=False, seed=0, row_tile=None):
    """x: (S, B, D).  Returns dropout(x + pe[:S]) with PyTorch semantics."""
    S, B, D = x.shape
    consts_np, n_rows, n_cols, row_divisor = _plan_view(S, B, D)
    x2 = x.reshape(n_rows, n_cols)                  # free row-major view, lane-dense slab
    itemsize = jnp.dtype(x.dtype).itemsize
    pack = _sublane_pack(itemsize)

    if row_tile is None:
        row_tile = _choose_row_tile(n_rows, n_cols, itemsize)
    else:
        row_tile = min(int(row_tile), n_rows)
        if row_tile != n_rows:
            row_tile = min(max(pack, (row_tile // pack) * pack), n_rows)

    num_tiles = int(pl.cdiv(n_rows, row_tile))
    grid = (num_tiles,)
    on_tpu = jax.default_backend() == "tpu"
    use_hw_prng = on_tpu and training and p > 0.0

    kernel = _build_kernel(row_divisor=row_divisor, p=p, training=training,
                           use_hw_prng=use_hw_prng)

    consts = jnp.asarray(consts_np)                                # (2, L) f32
    row_spec = pl.BlockSpec((row_tile, n_cols), lambda i: (i, 0))
    const_spec = pl.BlockSpec((2, n_cols), lambda i: (0, 0))       # resident across all tiles

    n_elems = n_rows * n_cols
    bytes_accessed = 2 * n_elems * itemsize + consts_np.size * 4

    if not (training and p > 0.0):
        inputs = (consts, x2)
        in_specs = [const_spec, row_spec]
        flops = 3 * n_elems
    elif use_hw_prng:
        inputs = (jnp.asarray([seed], dtype=jnp.int32), consts, x2)
        in_specs = [pl.BlockSpec(memory_space=pltpu.MemorySpace.SMEM), const_spec, row_spec]
        flops = 6 * n_elems
    else:
        # Non-TPU fallback: stream jax.random bits from HBM instead of the on-chip PRNG.
        bits = jax.random.bits(jax.random.PRNGKey(seed), (n_rows, n_cols), dtype=jnp.uint32)
        inputs = (consts, x2, bits)
        in_specs = [const_spec, row_spec, pl.BlockSpec((row_tile, n_cols), lambda i: (i, 0))]
        flops = 6 * n_elems
        bytes_accessed += n_elems * 4

    cost = pl.CostEstimate(flops=flops, transcendentals=n_elems,
                           bytes_accessed=bytes_accessed)

    out2 = None
    last_err = None
    for params in _compiler_param_attempts(on_tpu, num_tiles):
        try:
            out2 = pl.pallas_call(
                kernel,
                out_shape=jax.ShapeDtypeStruct((n_rows, n_cols), x.dtype),
                grid=grid,
                in_specs=in_specs,
                out_specs=pl.BlockSpec((row_tile, n_cols), lambda i: (i, 0)),
                compiler_params=params,
                cost_estimate=cost,
            )(*inputs)
            break
        except Exception as err:          # e.g. CORE_PARALLEL unsupported -> retry "parallel"
            last_err = err
            out2 = None
    if out2 is None:
        raise last_err
    return out2.reshape(S, B, D)


def pe_reference(seq_len, d_model):
    """Numpy replica of the PyTorch pe buffer, shape (seq_len, 1, d_model)."""
    position = np.arange(seq_len, dtype=np.float32)[:, None]
    div_term = np.exp(np.arange(0, d_model, 2, dtype=np.float32)
                      * (-math.log(10000.0) / d_model))
    pe = np.zeros((seq_len, d_model), dtype=np.float32)
    pe[:, 0::2] = np.sin(position * div_term)
    pe[:, 1::2] = np.cos(position * div_term)
    return pe[:, None, :]


if __name__ == "__main__":
    P = 0.1

    # 1) Eval mode, module-consistent small shape (S=8, B=2, D=32):
    #    packed lane-dense position view (4, 128).
    S, B, D = 8, 2, 32
    x = jax.random.normal(jax.random.PRNGKey(0), (S, B, D), dtype=jnp.float32)
    out = jax.block_until_ready(positional_encoding_forward(x, p=P, training=False))
    ref = np.asarray(x) + pe_reference(S, D)
    np.testing.assert_allclose(np.asarray(out), ref, rtol=1e-4, atol=1e-4)

    # 2) Eval mode, multi-tile grid with a partial last block (view (20, 128), tile 8).
    S2, B2, D2 = 40, 2, 32
    x2 = jax.random.normal(jax.random.PRNGKey(1), (S2, B2, D2), dtype=jnp.float32)
    out2 = jax.block_until_ready(
        positional_encoding_forward(x2, p=P, training=False, row_tile=8))
    ref2 = np.asarray(x2) + pe_reference(S2, D2)
    np.testing.assert_allclose(np.asarray(out2), ref2, rtol=1e-4, atol=1e-4)

    # 3) Eval mode, d_model already a lane multiple (S=8, B=2, D=128):
    #    rows view (16, 128), two tiles, per-row position = row // B.
    S3, B3, D3 = 8, 2, 128
    x3 = jax.random.normal(jax.random.PRNGKey(2), (S3, B3, D3), dtype=jnp.float32)
    out3 = jax.block_until_ready(
        positional_encoding_forward(x3, p=P, training=False, row_tile=8))
    ref3 = np.asarray(x3) + pe_reference(S3, D3)
    np.testing.assert_allclose(np.asarray(out3), ref3, rtol=1e-4, atol=1e-4)

    # 4) bf16 input (16-row sublane packing, f32 compute inside the kernel).
    x4 = x3.astype(jnp.bfloat16)
    out4 = jax.block_until_ready(positional_encoding_forward(x4, p=P, training=False))
    ref4 = np.asarray(x4).astype(np.float32) + pe_reference(S3, D3)
    np.testing.assert_allclose(np.asarray(out4).astype(np.float32), ref4,
                               rtol=2e-2, atol=2e-2)

    # 5) Training mode (inverted dropout applied inside the kernel).
    out_t = jax.block_until_ready(
        positional_encoding_forward(x, p=P, training=True, seed=0))
    assert out_t.shape == (S, B, D)
    scaled = (np.asarray(x) + pe_reference(S, D)) / (1.0 - P)
    out_np = np.asarray(out_t)
    # every element must be either dropped (0) or the survivor-scaled value
    assert np.all(np.minimum(np.abs(out_np), np.abs(out_np - scaled)) < 1e-3), \
        "dropout output is neither 0 nor the scaled survivor"

    print("KERNEL_OK")
</pallas_src>

<mosaic_0001>
module attributes {stable_mosaic.version = 11 : i64} {
  func.func @kernel(%arg0: i32, %arg1: memref<2x128xf32, #tpu.memory_space<vmem>>, %arg2: memref<4x128xf32, #tpu.memory_space<vmem>>, %arg3: memref<4x128xf32, #tpu.memory_space<vmem>>) attributes {dimension_semantics = [#tpu.dimension_semantics<arbitrary>], iteration_bounds = array<i64: 1>, scalar_prefetch = 0 : i64, scratch_operands = 0 : i64, tpu.core_type = #tpu.core_type<tc>, window_params = [{pipeline_mode = #tpu.pipeline_mode<synchronous>, transform_indices = @transform_0, window_bounds = array<i64: 2, 128>}, {transform_indices = @transform_1, window_bounds = array<i64: 4, 128>}, {transform_indices = @transform_2, window_bounds = array<i64: 4, 128>}]} {
    %c4_i32 = arith.constant 4 : i32
    %0 = arith.muli %arg0, %c4_i32 : i32
    %1 = tpu.iota {dimensions = array<i32: 0>} : vector<4x1xi32>
    %2 = vector.broadcast %0 : i32 to vector<4x1xi32>
    %3 = arith.addi %2, %1 : vector<4x1xi32>
    %4 = arith.sitofp %3 : vector<4x1xi32> to vector<4x1xf32>
    %c0 = arith.constant 0 : index
    %c0_0 = arith.constant 0 : index
    %5 = vector.load %arg1[%c0, %c0_0] : memref<2x128xf32, #tpu.memory_space<vmem>>, vector<1x128xf32>
    %c1 = arith.constant 1 : index
    %c0_1 = arith.constant 0 : index
    %6 = vector.load %arg1[%c1, %c0_1] : memref<2x128xf32, #tpu.memory_space<vmem>>, vector<1x128xf32>
    %7 = vector.broadcast %4 : vector<4x1xf32> to vector<4x128xf32>
    %8 = vector.broadcast %5 : vector<1x128xf32> to vector<4x128xf32>
    %9 = arith.mulf %7, %8 : vector<4x128xf32>
    %10 = vector.broadcast %6 : vector<1x128xf32> to vector<4x128xf32>
    %11 = arith.addf %9, %10 : vector<4x128xf32>
    %12 = math.cos %11 : vector<4x128xf32>
    %c0_2 = arith.constant 0 : index
    %c0_3 = arith.constant 0 : index
    %13 = vector.load %arg2[%c0_2, %c0_3] : memref<4x128xf32, #tpu.memory_space<vmem>>, vector<4x128xf32>
    %14 = arith.addf %13, %12 : vector<4x128xf32>
    %c0_4 = arith.constant 0 : index
    %c0_5 = arith.constant 0 : index
    %15 = vector.load %arg3[%c0_4, %c0_5] : memref<4x128xf32, #tpu.memory_space<vmem>>, vector<4x128xf32>
    tpu.vector_store %arg3[%c0_4, %c0_5], %14 {strides = array<i32>} : memref<4x128xf32, #tpu.memory_space<vmem>>, vector<4x128xf32>,
    return
  }
  func.func @transform_0(%arg0: i32) -> (i32, i32) {
    %c0_i32 = arith.constant 0 : i32
    %c0_i32_0 = arith.constant 0 : i32
    %c0_i32_1 = arith.constant 0 : i32
    return %c0_i32, %c0_i32_0 : i32, i32
  }
  func.func @transform_1(%arg0: i32) -> (i32, i32) {
    %c0_i32 = arith.constant 0 : i32
    %c0_i32_0 = arith.constant 0 : i32
    return %arg0, %c0_i32 : i32, i32
  }
  func.func @transform_2(%arg0: i32) -> (i32, i32) {
    %c0_i32 = arith.constant 0 : i32
    %c0_i32_0 = arith.constant 0 : i32
    return %arg0, %c0_i32 : i32, i32
  }
}

</mosaic_0001>

<llo_original>
// kernel: tpu_custom_call.1
$region0: #{tpu_custom_call.1}
  #allocation0 [shape = 'u32[]', space=smem, size = 0x4, offset = 0x4, fixed_abs, tag = 'smem constant byte address 0x4 - core index']
  #allocation1 [shape = 'u32[72,128]{1,0:T(1,128)}', space=vmem, size = 0x9000, scoped, tag = 'internal scratch']
  %s0 = inlined_call_operand.hbm [shape: f32[2,128], index: 0, kind: input, shape index: {}]
  %s1 = inlined_call_operand.hbm [shape: f32[4,128], index: 1, kind: input, shape index: {}]
  %s2 = inlined_call_operand.hbm [shape: f32[4,128], index: 2, kind: output, shape index: {}]
  %s3 = sld [smem:[#allocation0]]
  $region26: #{tpu_custom_call.1} parent=0
    _
  %s5 = ssub.s32 1, %s3
  %s6 = scalar_select 0, %s5, %s3
  $region1: #{tpu_custom_call.1} parent=0
    #allocation2 [shape = 'u8[1024]{0}', space=vmem, size = 0x400, scoped, tag = 'input window, operand 0, single buffered']
    #allocation3 [shape = 's32[1]{0}', space=sflag, size = 0x4, scoped, tag = 'scoped memory for tpu_custom_call.1']
    #allocation4 [shape = 's32[1]{0}', space=sflag, size = 0x4, scoped, tag = 'scoped memory for tpu_custom_call.1']
    #allocation5 [shape = 'u8[2048]{0}', space=vmem, size = 0x800, scoped, tag = 'input window, operand 1, single buffered']
    #allocation6 [shape = 's32[1]{0}', space=sflag, size = 0x4, scoped, tag = 'scoped memory for tpu_custom_call.1']
    #allocation7 [shape = 'u8[2048]{0}', space=vmem, size = 0x800, scoped, tag = 'output window, operand 0, single buffered']
    %7 = vsyncpa [#allocation3], 0
    %8 = vsyncpa [#allocation6], 0
    %9 = vsyncpa [#allocation4], 0
    // Predicated region
    $region2: #{tpu_custom_call.1} parent=1 // pred_check
      _
    $region3: #{tpu_custom_call.1} parent=1 // pred_check_branch
      %11 = sbr.rel (0) target = $region5
    $region4: #{tpu_custom_call.1} parent=1 // pred_region
      %13 = vsyncadd [#allocation3], 0
      %s15 = sshll.u32 %s0, 4
      %s16 = int_to_ptr.hbm [resolvable:$true] %s15
      %s17 = sshll.u32 [#allocation2], 4
      %s18 = int_to_ptr.vmem [resolvable:$true] %s17
      %20 = dma.hbm_to_vmem [thread:$0]  %s16, 32, %s18, [#allocation3]
    $region5: #{tpu_custom_call.1} parent=1 // pred_fallthru
      _
    // Predicated region
    $region6: #{tpu_custom_call.1} parent=1 // pred_check
      _
    $region7: #{tpu_custom_call.1} parent=1 // pred_check_branch
      %22 = sbr.rel (0) target = $region9
    $region8: #{tpu_custom_call.1} parent=1 // pred_region
      %24 = vsyncadd [#allocation6], 0
      %s26 = sshll.u32 %s1, 4
      %s27 = int_to_ptr.hbm [resolvable:$true] %s26
      %s28 = sshll.u32 [#allocation5], 4
      %s29 = int_to_ptr.vmem [resolvable:$true] %s28
      %31 = dma.hbm_to_vmem [thread:$0]  %s27, 64, %s29, [#allocation6]
    $region9: #{tpu_custom_call.1} parent=1 // pred_fallthru
      _
    // Predicated region
    $region10: #{tpu_custom_call.1} parent=1 // pred_check
      _
    $region11: #{tpu_custom_call.1} parent=1 // pred_check_branch
      %33 = sbr.rel (0) target = $region13
    $region12: #{tpu_custom_call.1} parent=1 // pred_region
      %35 = dma.done [#allocation3], 32
    $region13: #{tpu_custom_call.1} parent=1 // pred_fallthru
      _
    // Predicated region
    $region14: #{tpu_custom_call.1} parent=1 // pred_check
      _
    $region15: #{tpu_custom_call.1} parent=1 // pred_check_branch
      %37 = sbr.rel (0) target = $region17
    $region16: #{tpu_custom_call.1} parent=1 // pred_region
      %39 = dma.done [#allocation6], 64
    $region17: #{tpu_custom_call.1} parent=1 // pred_fallthru
      _
    %s40 = smul.u32 0, 4
    %v41 = vlaneseq
    %v42 = vshrl.u32 %v41, 7
    %v43 = vstv %s40
    %v44 = vadd.s32 %v43, %v42
    %v45 = vcvt.s32.f32 %v44
    %v46 = vld [vmem:[#allocation2] sm:$0x1]
    %v47 = vld [vmem:[#allocation2 + $0x1] sm:$0x1]
    %v48 = vperm.slane %v46, 0
    %v49 = vmul.f32 %v45, %v48
    %v50 = vperm.slane %v47, 0
    %v51 = vadd.f32 %v49, %v50
    %v52 = vand.u32 2147483647, %v51
    %vm53 = vcmp.le.f32.partialorder %v52, 0.7853982
    %vm54 = vcmp.lt.s32.totalorder %v51, 0
    %v55 = vand.u32 %v51, 2139095040
    %v56 = vshrl.u32 %v55, 23
    %v57 = vsub.s32 %v56, 127
    %v58 = vand.u32 2147483647, %v51
    %v59 = vand.u32 %v58, 8388607
    %v60 = vor.u32 %v59, 8388608
    %v61 = vsub.s32 0, %v60
    %v62 = vadd.s32 %v57, 1
    %vm63 = vcmp.gt.s32.totalorder %v62, 0
    %v64 = vsel %vm63, %v62, 0
    %v65 = vshrl.u32 %v64, 5
    %v66 = vand.u32 %v64, 31
    %v67 = vsub.s32 32, %v66
    %v68 = vshrl.u32 683565275, %v67
    %v69 = vshll.u32 683565275, %v66
    %v70 = vshrl.u32 2475754826, %v67
    %v71 = vor.u32 %v69, %v70
    %v72 = vshll.u32 2475754826, %v66
    %v73 = vshrl.u32 2131351028, %v67
    %v74 = vor.u32 %v72, %v73
    %v75 = vshll.u32 2131351028, %v66
    %v76 = vshrl.u32 2102212464, %v67
    %v77 = vor.u32 %v75, %v76
    %v78 = vshll.u32 2102212464, %v66
    %v79 = vshrl.u32 920167782, %v67
    %v80 = vor.u32 %v78, %v79
    %v81 = vshll.u32 920167782, %v66
    %v82 = vshrl.u32 1326507024, %v67
    %v83 = vor.u32 %v81, %v82
    %vm84 = vcmp.lt.s32.totalorder %v65, 1
    %vm85 = vcmp.lt.s32.totalorder %v65, 2
    %vm86 = vcmp.lt.s32.totalorder %v65, 3
    %vm87 = vcmp.lt.s32.totalorder %v65, 4
    %v88 = vsel %vm84, %v68, %v71
    %v89 = vsel %vm87, %v77, 2102212464
    %v90 = vsel %vm86, %v74, %v89
    %v91 = vsel %vm85, %v88, %v90
    %v92 = vsel %vm84, %v71, %v74
    %v93 = vsel %vm87, %v80, 920167782
    %v94 = vsel %vm86, %v77, %v93
    %v95 = vsel %vm85, %v92, %v94
    %v96 = vsel %vm84, %v74, %v77
    %v97 = vsel %vm87, %v83, 1326507024
    %v98 = vsel %vm86, %v80, %v97
    %v99 = vsel %vm85, %v96, %v98
    %v100 = vshll.u32 %v60, 8
    %v101 = vand.u32 %v100, 65535
    %v102 = vshrl.u32 %v100, 16
    %v103 = vand.u32 %v99, 65535
    %v104 = vshrl.u32 %v99, 16
    %v105 = vmul.u32 %v101, %v103
    %v106 = vmul.u32 %v101, %v104
    %v107 = vmul.u32 %v102, %v103
    %v108 = vmul.u32 %v102, %v104
    %v109 = vshll.u32 %v106, 16
    %v110 = vshrl.u32 %v106, 16
    %v111 = vshll.u32 %v107, 16
    %v112 = vshrl.u32 %v107, 16
    %vm113 = vc.u32 %v105, %v109
    %v114 = vsel %vm113, 1, 0
    %v115 = vadd.s32 %v105, %v109
    %v116 = vadd.s32 %v108, %v114
    %vm117 = vc.u32 %v115, %v111
    %v118 = vsel %vm117, 1, 0
    %v119 = vadd.s32 %v115, %v111
    %v120 = vadd.s32 %v116, %v118
    %v121 = vadd.s32 %v120, %v110
    %v122 = vadd.s32 %v121, %v112
    %v123 = vand.u32 %v100, 65535
    %v124 = vshrl.u32 %v100, 16
    %v125 = vand.u32 %v95, 65535
    %v126 = vshrl.u32 %v95, 16
    %v127 = vmul.u32 %v123, %v125
    %v128 = vmul.u32 %v123, %v126
    %v129 = vmul.u32 %v124, %v125
    %v130 = vmul.u32 %v124, %v126
    %v131 = vshll.u32 %v128, 16
    %v132 = vshrl.u32 %v128, 16
    %v133 = vshll.u32 %v129, 16
    %v134 = vshrl.u32 %v129, 16
    %vm135 = vc.u32 %v127, %v131
    %v136 = vsel %vm135, 1, 0
    %v137 = vadd.s32 %v127, %v131
    %v138 = vadd.s32 %v130, %v136
    %vm139 = vc.u32 %v137, %v133
    %v140 = vsel %vm139, 1, 0
    %v141 = vadd.s32 %v137, %v133
    %v142 = vadd.s32 %v138, %v140
    %v143 = vadd.s32 %v142, %v132
    %v144 = vadd.s32 %v143, %v134
    %v145 = vmul.u32 %v100, %v91
    %v146 = vadd.s32 %v122, %v141
    %vm147 = vc.u32 %v122, %v141
    %v148 = vadd.s32 %v144, 1
    %v149 = vsel %vm147, %v148, %v144
    %v150 = vadd.s32 %v145, %v149
    %v151 = vadd.s32 %v150, 536870912
    %v152 = vshrl.u32 %v151, 30
    %v153 = vshll.u32 %v152, 30
    %v154 = vsub.s32 %v150, %v153
    %vm155 = vcmp.lt.s32.totalorder %v154, 0
    %v156 = vsub.s32 0, %v154
    %v157 = vsel %vm155, %v156, %v154
    %v158 = vclz %v157
    %v159 = vsub.s32 %v158, 2
    %vm160 = vcmp.gt.s32.totalorder 0, %v159
    %v161 = vsel %vm160, 0, %v159
    %v162 = vsub.s32 32, %v161
    %v163 = vshll.u32 %v154, %v161
    %v164 = vshrl.u32 %v146, %v162
    %v165 = vor.u32 %v163, %v164
    %v166 = vsub.s32 4294967266, %v161
    %v167 = vadd.s32 %v166, 127
    %v168 = vshll.u32 %v167, 23
    %v169 = vor.u32 4788187, %v168
    %v170 = vand.u32 2147483647, %v169
    %v172 = vcvt.s32.f32 %v165
    %v173 = vmul.f32 %v172, %v170
    %v174 = vxor.u32 %v173, 2147483648
    %v175 = vsel %vm54, %v174, %v173
    %v176 = vsub.s32 4, %v152
    %v177 = vsel %vm54, %v176, %v152
    %v178 = vsel %vm53, %v51, %v175
    %v179 = vsel %vm53, 0, %v177
    %v180 = vmul.f32 %v178, %v178
    %v181 = vmul.f32 %v180, -0.001358992
    %v182 = vadd.f32 %v181, 0.041655596
    %v183 = vmul.f32 %v180, %v182
    %v184 = vadd.f32 %v183, -0.4999988
    %v185 = vmul.f32 %v180, %v184
    %v186 = vadd.f32 1.0, %v185
    %v187 = vmul.f32 %v178, %v178
    %v188 = vmul.f32 %v187, -0.00019511016
    %v189 = vadd.f32 %v188, 0.008332121
    %v190 = vmul.f32 %v187, %v189
    %v191 = vadd.f32 %v190, -0.16666654
    %v192 = vmul.f32 %v187, %v191
    %v193 = vadd.f32 %v192, 1.0
    %v194 = vmul.f32 %v193, %v178
    %vm195 = vweird.f32 %v51
    %v196 = vand.u32 %v179, 3
    %vm197 = vcmp.lt.s32.totalorder %v196, 2
    %vm198 = vcmp.eq.s32.totalorder %v196, 0
    %v199 = vxor.u32 %v194, 2147483648
    %v200 = vsel %vm198, %v186, %v199
    %vm201 = vcmp.eq.s32.totalorder %v196, 2
    %v202 = vxor.u32 %v186, 2147483648
    %v203 = vsel %vm201, %v202, %v194
    %v204 = vsel %vm197, %v200, %v203
    %v205 = vsel %vm195, nan, %v204
    %v206 = vld [vmem:[#allocation5] sm:$0xf]
    %v207 = vadd.f32 %v206, %v205
    %208 = vst [vmem:[#allocation7] sm:$0xf] %v207
    // Predicated region
    $region18: #{tpu_custom_call.1} parent=1 // pred_check
      _
    $region19: #{tpu_custom_call.1} parent=1 // pred_check_branch
      %210 = sbr.rel (0) target = $region21
    $region20: #{tpu_custom_call.1} parent=1 // pred_region
      %212 = vsyncadd [#allocation4], 0
      %s214 = sshll.u32 [#allocation7], 4
      %s215 = int_to_ptr.vmem [resolvable:$true] %s214
      %s216 = sshll.u32 %s2, 4
      %s217 = int_to_ptr.hbm [resolvable:$true] %s216
      %219 = dma.vmem_to_hbm [thread:$0]  %s215, 64, %s217, [#allocation4]
    $region21: #{tpu_custom_call.1} parent=1 // pred_fallthru
      _
    // Predicated region
    $region22: #{tpu_custom_call.1} parent=1 // pred_check
      _
    $region23: #{tpu_custom_call.1} parent=1 // pred_check_branch
      %221 = sbr.rel (0) target = $region25
    $region24: #{tpu_custom_call.1} parent=1 // pred_region
      %223 = dma.done [#allocation4], 64
    $region25: #{tpu_custom_call.1} parent=1 // pred_fallthru
      _
    %224 = vsyncpa [#allocation3], 1
    %225 = vsyncpa [#allocation6], 1
    %226 = vsyncpa [#allocation4], 1

</llo_original>
